<compile_context>
chip_gen: v7x
topology: tpu7x:2x2x1
jax: 0.10.0
libtpu: 0.0.40
codegen_flags: <defaults>
</compile_context>

<pallas_src>
import numpy as np
import jax
import jax.numpy as jnp
from jax.experimental import pallas as pl
from jax.experimental.pallas import tpu as pltpu


# ----------------------------------------------------------------------------- helpers
def _round_up(x, m):
    return (x + m - 1) // m * m


def _sub_granule(itemsize):
    # sublane packing granule: 8 rows of 32-bit, 16 of 16-bit, 32 of 8-bit
    return max(1, 8 * (4 // itemsize))


def _padded_2d_bytes(rows, lanes, itemsize):
    """VMEM footprint of a 2-D (sublane, lane) tile, including layout padding."""
    return (_round_up(max(rows, 1), _sub_granule(itemsize))
            * _round_up(max(lanes, 1), 128) * itemsize)


def _vmem_capacity_bytes():
    try:
        return int(pltpu.get_tpu_info().vmem_capacity_bytes)
    except Exception:
        return 64 * 1024 * 1024  # conservative: v7x per-TensorCore VMEM


# ----------------------------------------------------------------------------- kernels
def _make_lane_concat_kernel(offsets, widths):
    """Each input block is copied into its static LANE slab of the output block."""
    def kernel(*refs):
        *x_refs, o_ref = refs
        for x_ref, off, w in zip(x_refs, offsets, widths):
            o_ref[:, off:off + w] = x_ref[...].astype(o_ref.dtype)
    return kernel


def _make_channel_concat_kernel(offsets, sizes):
    """3-D fallback: copy each input into its static channel (sublane) slab."""
    def kernel(*refs):
        *x_refs, o_ref = refs
        for x_ref, off, c in zip(x_refs, offsets, sizes):
            o_ref[:, off:off + c, :] = x_ref[...].astype(o_ref.dtype)
    return kernel


# ----------------------------------------------------------------------------- wrapper
def concat_forward(xs, dimension=1):
    """Equivalent of Concat(dimension).forward(xs) == torch.cat(xs, dimension)."""
    xs = list(xs)
    assert len(xs) >= 1
    rank = xs[0].ndim
    d = dimension % rank
    out_dtype = jnp.result_type(*[x.dtype for x in xs])

    base = xs[0].shape
    for x in xs:
        assert x.ndim == rank
        for ax in range(rank):
            if ax != d:
                assert x.shape[ax] == base[ax], "non-concat dims must match"

    outer = int(np.prod(base[:d], dtype=np.int64)) if d > 0 else 1
    inner = int(np.prod(base[d + 1:], dtype=np.int64)) if d + 1 < rank else 1
    channel_sizes = [int(x.shape[d]) for x in xs]
    c_total = int(sum(channel_sizes))
    out_shape_full = tuple(base[:d]) + (c_total,) + tuple(base[d + 1:])

    itemsizes = [jnp.dtype(x.dtype).itemsize for x in xs]
    out_itemsize = jnp.dtype(out_dtype).itemsize

    # Generation-aware VMEM budget for the double-buffered working set
    # (2 x (every input block + output block)):  ~24 MiB on v7x (64 MiB/TC),
    # up to 40 MiB on v5e/v6e (128 MiB, limit raised explicitly below).
    vmem_cap = _vmem_capacity_bytes()
    buffered_budget = min((vmem_cap * 3) // 8, 40 << 20)
    block_budget = buffered_budget // 2               # single copy of all blocks
    vmem_limit = int(min(vmem_cap, buffered_budget + (8 << 20)))

    in_bytes = sum(int(np.prod(x.shape)) * isz for x, isz in zip(xs, itemsizes))
    out_bytes = int(np.prod(out_shape_full, dtype=np.int64)) * out_itemsize
    cost = pl.CostEstimate(flops=0, transcendentals=0,
                           bytes_accessed=in_bytes + out_bytes)

    # Lane-flattened view: [outer, c_i * inner] per input, [outer, c_total*inner] out.
    widths = [c * inner for c in channel_sizes]
    lane_offsets = np.cumsum([0] + widths)[:-1].tolist()

    def flat_block_bytes(rows):
        b = _padded_2d_bytes(rows, c_total * inner, out_itemsize)
        for w, isz in zip(widths, itemsizes):
            b += _padded_2d_bytes(rows, w, isz)
        return b

    if flat_block_bytes(min(outer, 8)) <= block_budget:
        # -------- Path L: lane-flattened 2-D view, concat along lanes --------------
        xs2 = [x.reshape(outer, w) for x, w in zip(xs, widths)]

        per_row = _round_up(c_total * inner, 128) * out_itemsize
        per_row += sum(_round_up(w, 128) * isz for w, isz in zip(widths, itemsizes))
        fit_rows = max(1, block_budget // per_row)
        cap = min(outer, fit_rows)
        if outer >= 16:
            # keep >=~4 grid steps: pipeline overlap + both v7x TensorCores busy
            cap = min(cap, pl.cdiv(outer, 4))
        if cap >= outer:
            tile = outer                      # full extent (always layout-legal)
        elif cap >= 8:
            tile = (cap // 8) * 8             # sublane-aligned tile
        else:
            tile = min(8, outer)              # 1..8 rows pad to 8 sublanes anyway

        grid = (pl.cdiv(outer, tile),)        # ragged last block handled by Pallas
        in_specs = [pl.BlockSpec((tile, w), lambda o: (o, 0)) for w in widths]
        out_spec = pl.BlockSpec((tile, c_total * inner), lambda o: (o, 0))

        out2 = pl.pallas_call(
            _make_lane_concat_kernel(lane_offsets, widths),
            out_shape=jax.ShapeDtypeStruct((outer, c_total * inner), out_dtype),
            grid=grid,
            in_specs=in_specs,
            out_specs=out_spec,
            compiler_params=pltpu.CompilerParams(
                dimension_semantics=("parallel",),
                vmem_limit_bytes=vmem_limit),
            cost_estimate=cost,
        )(*xs2)
        return out2.reshape(out_shape_full)

    # -------- Path S: one flattened row is too big; tile outer AND inner -----------
    # Keep the 3-D view and tile the inner (lane) axis with 128-aligned blocks; the
    # concat axis sits in the sublane position here, which is still unmasked for
    # realistic channel counts (multiples of 8/16).
    xs3 = [x.reshape(outer, c, inner) for x, c in zip(xs, channel_sizes)]
    ch_offsets = np.cumsum([0] + channel_sizes)[:-1].tolist()

    def blk_bytes(rows, lanes):
        b = (rows * _round_up(c_total, _sub_granule(out_itemsize))
             * _round_up(lanes, 128) * out_itemsize)
        for c, isz in zip(channel_sizes, itemsizes):
            b += rows * _round_up(c, _sub_granule(isz)) * _round_up(lanes, 128) * isz
        return b

    if inner <= 128:
        tile_inner = inner
    else:
        chunks = max(1, block_budget // max(1, blk_bytes(1, 128)))
        tile_inner = min(chunks * 128, _round_up(inner, 128))
    tile_o = max(1, min(outer, block_budget // max(1, blk_bytes(1, tile_inner))))

    grid = (pl.cdiv(outer, tile_o), pl.cdiv(inner, tile_inner))
    in_specs = [pl.BlockSpec((tile_o, c, tile_inner), lambda o, t: (o, 0, t))
                for c in channel_sizes]
    out_spec = pl.BlockSpec((tile_o, c_total, tile_inner), lambda o, t: (o, 0, t))

    out3 = pl.pallas_call(
        _make_channel_concat_kernel(ch_offsets, channel_sizes),
        out_shape=jax.ShapeDtypeStruct((outer, c_total, inner), out_dtype),
        grid=grid,
        in_specs=in_specs,
        out_specs=out_spec,
        compiler_params=pltpu.CompilerParams(
            dimension_semantics=("parallel", "parallel"),
            vmem_limit_bytes=vmem_limit),
        cost_estimate=cost,
    )(*xs3)
    return out3.reshape(out_shape_full)


# ----------------------------------------------------------------------------- demo
if __name__ == "__main__":
    key = jax.random.PRNGKey(0)
    k1, k2, k3, k4, k5 = jax.random.split(key, 5)

    # Typical YOLO neck usage: concat feature maps along the channel dim (d=1).
    x1 = jax.random.normal(k1, (2, 4, 16, 16), dtype=jnp.float32)
    x2 = jax.random.normal(k2, (2, 8, 16, 16), dtype=jnp.float32)
    x3 = jax.random.normal(k3, (2, 4, 16, 16), dtype=jnp.float32)
    out = jax.block_until_ready(concat_forward([x1, x2, x3], dimension=1))
    ref = jnp.concatenate([x1, x2, x3], axis=1)
    assert out.shape == (2, 16, 16, 16), out.shape
    assert jnp.array_equal(out, ref)

    # Non-default concat dimension (last axis) through the same lane-concat path.
    y1 = jax.random.normal(k4, (2, 4, 8, 16), dtype=jnp.float32)
    y2 = jax.random.normal(k5, (2, 4, 8, 48), dtype=jnp.float32)
    out2 = jax.block_until_ready(concat_forward([y1, y2], dimension=3))
    assert out2.shape == (2, 4, 8, 64), out2.shape
    assert jnp.array_equal(out2, jnp.concatenate([y1, y2], axis=3))

    # Mixed-dtype concat: the cast happens inside the kernel (no extra HBM pass).
    z1 = x1.astype(jnp.bfloat16)
    out3 = jax.block_until_ready(concat_forward([z1, x2], dimension=1))
    ref3 = jnp.concatenate([z1.astype(jnp.float32), x2], axis=1)
    assert out3.dtype == jnp.float32 and jnp.array_equal(out3, ref3)

    print("KERNEL_OK")
</pallas_src>

<mosaic_0001>
module attributes {stable_mosaic.version = 11 : i64} {
  func.func @kernel(%arg0: i32, %arg1: memref<2x1024xf32, #tpu.memory_space<vmem>>, %arg2: memref<2x2048xf32, #tpu.memory_space<vmem>>, %arg3: memref<2x1024xf32, #tpu.memory_space<vmem>>, %arg4: memref<2x4096xf32, #tpu.memory_space<vmem>>) attributes {dimension_semantics = [#tpu.dimension_semantics<parallel>], iteration_bounds = array<i64: 1>, scalar_prefetch = 0 : i64, scratch_operands = 0 : i64, tpu.core_type = #tpu.core_type<tc>, window_params = [{transform_indices = @transform_0, window_bounds = array<i64: 2, 1024>}, {transform_indices = @transform_1, window_bounds = array<i64: 2, 2048>}, {transform_indices = @transform_2, window_bounds = array<i64: 2, 1024>}, {transform_indices = @transform_3, window_bounds = array<i64: 2, 4096>}]} {
    %c0 = arith.constant 0 : index
    %c0_0 = arith.constant 0 : index
    %0 = vector.load %arg1[%c0, %c0_0] : memref<2x1024xf32, #tpu.memory_space<vmem>>, vector<2x1024xf32>
    %c0_1 = arith.constant 0 : index
    %c0_2 = arith.constant 0 : index
    %1 = vector.load %arg4[%c0_1, %c0_2] : memref<2x4096xf32, #tpu.memory_space<vmem>>, vector<2x1024xf32>
    tpu.vector_store %arg4[%c0_1, %c0_2], %0 {strides = array<i32>} : memref<2x4096xf32, #tpu.memory_space<vmem>>, vector<2x1024xf32>,
    %c0_3 = arith.constant 0 : index
    %c0_4 = arith.constant 0 : index
    %2 = vector.load %arg2[%c0_3, %c0_4] : memref<2x2048xf32, #tpu.memory_space<vmem>>, vector<2x2048xf32>
    %c0_5 = arith.constant 0 : index
    %c1024 = arith.constant 1024 : index
    %3 = vector.load %arg4[%c0_5, %c1024] : memref<2x4096xf32, #tpu.memory_space<vmem>>, vector<2x2048xf32>
    tpu.vector_store %arg4[%c0_5, %c1024], %2 {strides = array<i32>} : memref<2x4096xf32, #tpu.memory_space<vmem>>, vector<2x2048xf32>,
    %c0_6 = arith.constant 0 : index
    %c0_7 = arith.constant 0 : index
    %4 = vector.load %arg3[%c0_6, %c0_7] : memref<2x1024xf32, #tpu.memory_space<vmem>>, vector<2x1024xf32>
    %c0_8 = arith.constant 0 : index
    %c3072 = arith.constant 3072 : index
    %5 = vector.load %arg4[%c0_8, %c3072] : memref<2x4096xf32, #tpu.memory_space<vmem>>, vector<2x1024xf32>
    tpu.vector_store %arg4[%c0_8, %c3072], %4 {strides = array<i32>} : memref<2x4096xf32, #tpu.memory_space<vmem>>, vector<2x1024xf32>,
    return
  }
  func.func @transform_0(%arg0: i32) -> (i32, i32) {
    %c0_i32 = arith.constant 0 : i32
    %c0_i32_0 = arith.constant 0 : i32
    return %arg0, %c0_i32 : i32, i32
  }
  func.func @transform_1(%arg0: i32) -> (i32, i32) {
    %c0_i32 = arith.constant 0 : i32
    %c0_i32_0 = arith.constant 0 : i32
    return %arg0, %c0_i32 : i32, i32
  }
  func.func @transform_2(%arg0: i32) -> (i32, i32) {
    %c0_i32 = arith.constant 0 : i32
    %c0_i32_0 = arith.constant 0 : i32
    return %arg0, %c0_i32 : i32, i32
  }
  func.func @transform_3(%arg0: i32) -> (i32, i32) {
    %c0_i32 = arith.constant 0 : i32
    %c0_i32_0 = arith.constant 0 : i32
    return %arg0, %c0_i32 : i32, i32
  }
}

</mosaic_0001>

<llo_original>
// kernel: tpu_custom_call.1
$region0: #{tpu_custom_call.1}
  #allocation0 [shape = 'u32[]', space=smem, size = 0x4, offset = 0x4, fixed_abs, tag = 'smem constant byte address 0x4 - core index']
  #allocation1 [shape = 'u32[144,128]{1,0:T(1,128)}', space=vmem, size = 0x12000, scoped, tag = 'internal scratch']
  %s0 = inlined_call_operand.hbm [shape: f32[2,1024], index: 0, kind: input, shape index: {}]
  %s1 = inlined_call_operand.hbm [shape: f32[2,2048], index: 1, kind: input, shape index: {}]
  %s2 = inlined_call_operand.hbm [shape: f32[2,1024], index: 2, kind: input, shape index: {}]
  %s3 = inlined_call_operand.hbm [shape: f32[2,4096], index: 3, kind: output, shape index: {}]
  %s4 = sld [smem:[#allocation0]]
  $region34: #{tpu_custom_call.1} parent=0
    _
  %s6 = ssub.s32 1, %s4
  %s7 = scalar_select 0, %s6, %s4
  $region1: #{tpu_custom_call.1} parent=0
    #allocation2 [shape = 'u8[8192]{0}', space=vmem, size = 0x2000, scoped, tag = 'input window, operand 0, single buffered']
    #allocation3 [shape = 's32[1]{0}', space=sflag, size = 0x4, scoped, tag = 'scoped memory for tpu_custom_call.1']
    #allocation4 [shape = 's32[1]{0}', space=sflag, size = 0x4, scoped, tag = 'scoped memory for tpu_custom_call.1']
    #allocation5 [shape = 'u8[16384]{0}', space=vmem, size = 0x4000, scoped, tag = 'input window, operand 1, single buffered']
    #allocation6 [shape = 's32[1]{0}', space=sflag, size = 0x4, scoped, tag = 'scoped memory for tpu_custom_call.1']
    #allocation7 [shape = 'u8[8192]{0}', space=vmem, size = 0x2000, scoped, tag = 'input window, operand 2, single buffered']
    #allocation8 [shape = 'u8[32768]{0}', space=vmem, size = 0x8000, scoped, tag = 'output window, operand 0, single buffered']
    %8 = vsyncpa [#allocation3], 0
    %9 = vsyncpa [#allocation6], 0
    %10 = vsyncpa [#allocation4], 0
    // Predicated region
    $region2: #{tpu_custom_call.1} parent=1 // pred_check
      _
    $region3: #{tpu_custom_call.1} parent=1 // pred_check_branch
      %12 = sbr.rel (0) target = $region5
    $region4: #{tpu_custom_call.1} parent=1 // pred_region
      %s14 = ssub.s32 256, 256
      %15 = vsyncadd [#allocation3], %s14
      %s17 = sshll.u32 [#allocation2], 4
      %s18 = int_to_ptr.vmem [resolvable:$true] %s17
      %20 = dma.hbm_to_vmem [thread:$0]  %s0, 256, %s18, [#allocation3]
    $region5: #{tpu_custom_call.1} parent=1 // pred_fallthru
      _
    // Predicated region
    $region6: #{tpu_custom_call.1} parent=1 // pred_check
      _
    $region7: #{tpu_custom_call.1} parent=1 // pred_check_branch
      %22 = sbr.rel (0) target = $region9
    $region8: #{tpu_custom_call.1} parent=1 // pred_region
      %s24 = ssub.s32 512, 512
      %25 = vsyncadd [#allocation6], %s24
      %s27 = sshll.u32 [#allocation5], 4
      %s28 = int_to_ptr.vmem [resolvable:$true] %s27
      %30 = dma.hbm_to_vmem [thread:$0]  %s1, 512, %s28, [#allocation6]
    $region9: #{tpu_custom_call.1} parent=1 // pred_fallthru
      _
    // Predicated region
    $region10: #{tpu_custom_call.1} parent=1 // pred_check
      _
    $region11: #{tpu_custom_call.1} parent=1 // pred_check_branch
      %32 = sbr.rel (0) target = $region13
    $region12: #{tpu_custom_call.1} parent=1 // pred_region
      %s34 = ssub.s32 256, 256
      %35 = vsyncadd [#allocation6], %s34
      %s37 = sshll.u32 [#allocation7], 4
      %s38 = int_to_ptr.vmem [resolvable:$true] %s37
      %40 = dma.hbm_to_vmem [thread:$0]  %s2, 256, %s38, [#allocation6]
    $region13: #{tpu_custom_call.1} parent=1 // pred_fallthru
      _
    // Predicated region
    $region14: #{tpu_custom_call.1} parent=1 // pred_check
      _
    $region15: #{tpu_custom_call.1} parent=1 // pred_check_branch
      %42 = sbr.rel (0) target = $region17
    $region16: #{tpu_custom_call.1} parent=1 // pred_region
      %43 = dma.done [#allocation3], 256
    $region17: #{tpu_custom_call.1} parent=1 // pred_fallthru
      _
    // Predicated region
    $region18: #{tpu_custom_call.1} parent=1 // pred_check
      _
    $region19: #{tpu_custom_call.1} parent=1 // pred_check_branch
      %45 = sbr.rel (0) target = $region21
    $region20: #{tpu_custom_call.1} parent=1 // pred_region
      %46 = dma.done [#allocation6], 512
    $region21: #{tpu_custom_call.1} parent=1 // pred_fallthru
      _
    // Predicated region
    $region22: #{tpu_custom_call.1} parent=1 // pred_check
      _
    $region23: #{tpu_custom_call.1} parent=1 // pred_check_branch
      %48 = sbr.rel (0) target = $region25
    $region24: #{tpu_custom_call.1} parent=1 // pred_region
      %49 = dma.done [#allocation6], 256
    $region25: #{tpu_custom_call.1} parent=1 // pred_fallthru
      _
    %v50 = vld [vmem:[#allocation2] sm:$0xff]
    %v51 = vld [vmem:[#allocation2 + $0x8] sm:$0xff]
    %52 = vst [vmem:[#allocation8] sm:$0xff] %v50
    %53 = vst [vmem:[#allocation8 + $0x8] sm:$0xff] %v51
    %v54 = vld [vmem:[#allocation5] sm:$0xff]
    %v55 = vld [vmem:[#allocation5 + $0x8] sm:$0xff]
    %v56 = vld [vmem:[#allocation5 + $0x10] sm:$0xff]
    %v57 = vld [vmem:[#allocation5 + $0x18] sm:$0xff]
    %58 = vst [vmem:[#allocation8 + $0x10] sm:$0xff] %v54
    %59 = vst [vmem:[#allocation8 + $0x18] sm:$0xff] %v55
    %60 = vst [vmem:[#allocation8 + $0x20] sm:$0xff] %v56
    %61 = vst [vmem:[#allocation8 + $0x28] sm:$0xff] %v57
    %v62 = vld [vmem:[#allocation7] sm:$0xff]
    %v63 = vld [vmem:[#allocation7 + $0x8] sm:$0xff]
    %64 = vst [vmem:[#allocation8 + $0x30] sm:$0xff] %v62
    %65 = vst [vmem:[#allocation8 + $0x38] sm:$0xff] %v63
    // Predicated region
    $region26: #{tpu_custom_call.1} parent=1 // pred_check
      _
    $region27: #{tpu_custom_call.1} parent=1 // pred_check_branch
      %67 = sbr.rel (0) target = $region29
    $region28: #{tpu_custom_call.1} parent=1 // pred_region
      %s69 = ssub.s32 1024, 1024
      %70 = vsyncadd [#allocation4], %s69
      %s72 = sshll.u32 [#allocation8], 4
      %s73 = int_to_ptr.vmem [resolvable:$true] %s72
      %75 = dma.vmem_to_hbm [thread:$0]  %s73, 1024, %s3, [#allocation4]
    $region29: #{tpu_custom_call.1} parent=1 // pred_fallthru
      _
    // Predicated region
    $region30: #{tpu_custom_call.1} parent=1 // pred_check
      _
    $region31: #{tpu_custom_call.1} parent=1 // pred_check_branch
      %77 = sbr.rel (0) target = $region33
    $region32: #{tpu_custom_call.1} parent=1 // pred_region
      %78 = dma.done [#allocation4], 1024
    $region33: #{tpu_custom_call.1} parent=1 // pred_fallthru
      _
    %79 = vsyncpa [#allocation3], 1
    %80 = vsyncpa [#allocation6], 1
    %81 = vsyncpa [#allocation4], 1

</llo_original>
